<compile_context>
chip_gen: v6e
topology: v6e:2x2x1
jax: 0.10.0
libtpu: 0.0.40
codegen_flags: <defaults>
</compile_context>

<pallas_src>
import functools

import jax
import jax.numpy as jnp
from jax import lax
from jax.experimental import pallas as pl
from jax.experimental.pallas import tpu as pltpu

LEAKY_SLOPE = 0.01   # torch.nn.LeakyReLU default
LN_EPS = 1e-5        # torch.nn.LayerNorm default


def _cdiv(a, b):
    return -(-a // b)


def _round_up(x, m):
    return ((x + m - 1) // m) * m


def _leaky_relu(h):
    return jnp.where(h > 0, h, LEAKY_SLOPE * h)


def _n_tiling(n_out, tn):
    """Output-feature tiling: tn_eff multiple of 128, Np multiple of tn_eff."""
    tn = _round_up(max(tn, 128), 128)
    tn_eff = min(tn, _round_up(n_out, 128))
    n_p = _round_up(n_out, tn_eff)
    return tn_eff, n_p


def _batch_tiling(batch, tm):
    """>=2 batch tiles when possible (v7x megacore) with bounded padding waste."""
    n_bt = max(2, _cdiv(batch, max(tm, 8)))
    tm_eff = _round_up(_cdiv(batch, n_bt), 8)
    n_bt = _cdiv(batch, tm_eff)
    return tm_eff, n_bt, tm_eff * n_bt


# ---------------------------------------------------------------------------------
# Kernel
# ---------------------------------------------------------------------------------
def decoder_kernel(z_ref, cat_ref, w0z_ref, w0c_ref, b0_ref,
                   w1_ref, b1_ref, w2_ref, b2_ref, o_ref, h_scr, *, h_true):
    mm_dtype = w0z_ref.dtype
    j = pl.program_id(1)   # output-feature tile index (inner, "arbitrary")

    # ---- hidden trunk: computed once per batch tile, reused for every N tile -------
    @pl.when(j == 0)
    def _compute_hidden():
        hp = b0_ref.shape[-1]
        if hp == h_true:
            mask, inv_n = None, None
        else:
            mask = (lax.broadcasted_iota(jnp.int32, (1, hp), 1) < h_true
                    ).astype(jnp.float32)
            inv_n = jnp.float32(1.0 / h_true)

        def layer_norm(h):
            # Pre-LN padded columns are exactly zero (zero-padded weight cols/bias),
            # so the mean needs no mask; only the centered term does.
            if mask is None:
                mean = jnp.mean(h, axis=-1, keepdims=True)
                d = h - mean
                var = jnp.mean(d * d, axis=-1, keepdims=True)     # biased, like torch
            else:
                mean = jnp.sum(h, axis=-1, keepdims=True) * inv_n
                d = (h - mean) * mask
                var = jnp.sum(d * d, axis=-1, keepdims=True) * inv_n
            return (h - mean) * lax.rsqrt(var + LN_EPS)

        # Layer 0: Linear([z, one_hot(cat)]) -> LayerNorm -> LeakyReLU
        h = jnp.dot(z_ref[...], w0z_ref[...], preferred_element_type=jnp.float32)
        ncp = w0c_ref.shape[0]
        onehot = (cat_ref[...] == lax.broadcasted_iota(jnp.int32, (1, ncp), 1)
                  ).astype(mm_dtype)
        h = h + jnp.dot(onehot, w0c_ref[...], preferred_element_type=jnp.float32)
        h = _leaky_relu(layer_norm(h + b0_ref[...]))

        # Layer 1: Linear -> LayerNorm -> LeakyReLU (no covariate re-injection)
        h = jnp.dot(h.astype(mm_dtype), w1_ref[...],
                    preferred_element_type=jnp.float32) + b1_ref[...]
        h = _leaky_relu(layer_norm(h))

        h_scr[...] = h.astype(mm_dtype)

    # ---- output head for this (batch tile, N tile): Linear -> Sigmoid --------------
    y = jnp.dot(h_scr[...], w2_ref[...],
                preferred_element_type=jnp.float32) + b2_ref[...]
    o_ref[...] = jax.nn.sigmoid(y).astype(o_ref.dtype)


# ---------------------------------------------------------------------------------
# Host-side wrappers
# ---------------------------------------------------------------------------------
def prepare_params(params, n_input, *, matmul_dtype=jnp.bfloat16, tn=1024):
    """Pad parameters to lane-dense shapes and cast matmul operands ONCE
    (hoisted out of the per-call path). Padded rows/cols are zero."""
    w0, b0, w1, b1, w2, b2 = (params["w0"], params["b0"], params["w1"],
                              params["b1"], params["w2"], params["b2"])
    n_in = n_input
    H = w0.shape[1]
    n_out = w2.shape[1]
    n_cat = w0.shape[0] - n_in

    hp = _round_up(H, 128)
    _, n_p = _n_tiling(n_out, tn)
    ncp = max(8, _round_up(max(n_cat, 1), 8))

    pad2 = lambda a, r, c: jnp.pad(a, ((0, r - a.shape[0]), (0, c - a.shape[1])))
    b0 = b0.reshape(1, -1)
    b1 = b1.reshape(1, -1)
    b2 = b2.reshape(1, -1)
    return {
        "w0z": pad2(w0[:n_in], n_in, hp).astype(matmul_dtype),   # z part of W0
        "w0c": pad2(w0[n_in:], ncp, hp).astype(matmul_dtype),    # one-hot part of W0
        "b0": pad2(b0, 1, hp),                                   # biases stay f32
        "w1": pad2(w1, hp, hp).astype(matmul_dtype),
        "b1": pad2(b1, 1, hp),
        "w2": pad2(w2, hp, n_p).astype(matmul_dtype),
        "b2": pad2(b2, 1, n_p),
    }


@functools.partial(jax.jit, static_argnames=("h_true", "tm", "tn", "out_dtype"))
def decoder_forward(z, cat_idx, prepped, *, h_true, tm=256, tn=1024,
                    out_dtype=jnp.float32):
    """Fused decoder forward.

    z: [B, n_input] f32; cat_idx: [B] int32 categorical covariate index.
    Returns the PADDED [Bp, Np] output (valid data = out[:B, :n_output]); the padding
    is returned as-is so the wrapper never materializes an extra full-output copy.
    """
    w0z, w0c, b0 = prepped["w0z"], prepped["w0c"], prepped["b0"]
    w1, b1, w2, b2 = prepped["w1"], prepped["b1"], prepped["w2"], prepped["b2"]

    B, n_in = z.shape
    ncp, hp = w0c.shape
    n_p = w2.shape[1]
    mm_dtype = w0z.dtype

    tn_eff = min(_round_up(max(tn, 128), 128), n_p)
    assert n_p % tn_eff == 0, "prepare_params() and decoder_forward() must use the same tn"
    grid_n = n_p // tn_eff

    tm_eff, grid_b, b_p = _batch_tiling(B, tm)

    z_p = jnp.pad(z, ((0, b_p - B), (0, 0))).astype(mm_dtype)
    cat_p = jnp.pad(cat_idx.astype(jnp.int32).reshape(B, 1), ((0, b_p - B), (0, 0)))

    # Constant-index parameter blocks: DMA'd once, single-buffered to save VMEM.
    const = lambda shape: pl.BlockSpec(shape, lambda i, j: (0,) * len(shape),
                                       pipeline_mode=pl.Buffered(1))

    # Explicit scoped-VMEM budget from the actual block footprint (+headroom).
    mm_b = jnp.dtype(mm_dtype).itemsize
    out_b = jnp.dtype(out_dtype).itemsize
    est = (2 * tm_eff * n_in * mm_b + 2 * tm_eff * 4            # z, cat (double buffered)
           + (n_in + ncp + hp) * hp * mm_b + 2 * hp * 4         # single-buffered consts
           + 2 * (hp * tn_eff * mm_b + tn_eff * 4)              # streamed W2, b2
           + 2 * tm_eff * tn_eff * out_b                        # streamed output
           + tm_eff * hp * mm_b                                 # h scratch
           + 6 * tm_eff * hp * 4)                               # f32 working set
    vmem_limit = int(min(max(2 * est, 32 * 2**20), 64 * 2**20))

    out = pl.pallas_call(
        functools.partial(decoder_kernel, h_true=h_true),
        out_shape=jax.ShapeDtypeStruct((b_p, n_p), out_dtype),
        grid_spec=pltpu.PrefetchScalarGridSpec(
            num_scalar_prefetch=0,
            grid=(grid_b, grid_n),
            in_specs=[
                pl.BlockSpec((tm_eff, n_in), lambda i, j: (i, 0)),   # z tile
                pl.BlockSpec((tm_eff, 1), lambda i, j: (i, 0)),      # cat index tile
                const((n_in, hp)),                                   # W0 (z rows)
                const((ncp, hp)),                                    # W0 (one-hot rows)
                const((1, hp)),                                      # b0
                const((hp, hp)),                                     # W1
                const((1, hp)),                                      # b1
                pl.BlockSpec((hp, tn_eff), lambda i, j: (0, j)),     # W2 N-tile (streamed)
                pl.BlockSpec((1, tn_eff), lambda i, j: (0, j)),      # b2 N-tile
            ],
            out_specs=pl.BlockSpec((tm_eff, tn_eff), lambda i, j: (i, j)),
            scratch_shapes=[pltpu.VMEM((tm_eff, hp), mm_dtype)],     # hidden activation
        ),
        compiler_params=pltpu.CompilerParams(
            dimension_semantics=("parallel", "arbitrary"),
            vmem_limit_bytes=vmem_limit),
    )(z_p, cat_p, w0z, w0c, b0, w1, b1, w2, b2)
    return out


# ---------------------------------------------------------------------------------
# Reference + test harness
# ---------------------------------------------------------------------------------
def init_params(key, n_input, n_hidden, n_output, n_cat):
    """Synthetic init mimicking nn.Linear's uniform(-1/sqrt(fan_in), 1/sqrt(fan_in))."""
    ks = jax.random.split(key, 6)
    din0 = n_input + n_cat

    def lin(kw, kb, fan_in, fan_out):
        bound = 1.0 / jnp.sqrt(fan_in)
        w = jax.random.uniform(kw, (fan_in, fan_out), jnp.float32, -bound, bound)
        b = jax.random.uniform(kb, (1, fan_out), jnp.float32, -bound, bound)
        return w, b

    w0, b0 = lin(ks[0], ks[1], din0, n_hidden)
    w1, b1 = lin(ks[2], ks[3], n_hidden, n_hidden)
    w2, b2 = lin(ks[4], ks[5], n_hidden, n_output)
    return {"w0": w0, "b0": b0, "w1": w1, "b1": b1, "w2": w2, "b2": b2}


def decoder_reference(z, cat_idx, params):
    """Pure-JAX f32 reference of the same forward pass (for validation)."""
    def ln(h):
        mean = jnp.mean(h, axis=-1, keepdims=True)
        var = jnp.mean((h - mean) ** 2, axis=-1, keepdims=True)
        return (h - mean) * lax.rsqrt(var + LN_EPS)

    n_cat = params["w0"].shape[0] - z.shape[1]
    x = jnp.concatenate([z, jax.nn.one_hot(cat_idx, n_cat, dtype=z.dtype)], axis=-1)
    h = _leaky_relu(ln(x @ params["w0"] + params["b0"]))
    h = _leaky_relu(ln(h @ params["w1"] + params["b1"]))
    return jax.nn.sigmoid(h @ params["w2"] + params["b2"])


if __name__ == "__main__":
    key = jax.random.PRNGKey(0)
    k_z, k_cat, k_p = jax.random.split(key, 3)

    # small shapes consistent with the module (B deliberately not a multiple of 8)
    B, n_input, n_hidden, n_output, n_cat = 12, 16, 32, 24, 3

    z = jax.random.normal(k_z, (B, n_input), dtype=jnp.float32)
    cat_idx = jax.random.randint(k_cat, (B,), 0, n_cat, dtype=jnp.int32)
    params = init_params(k_p, n_input, n_hidden, n_output, n_cat)

    ref = decoder_reference(z, cat_idx, params)

    # exact-path check (f32 matmul operands)
    prepped_f32 = prepare_params(params, n_input, matmul_dtype=jnp.float32)
    out_f32 = jax.block_until_ready(
        decoder_forward(z, cat_idx, prepped_f32, h_true=n_hidden))
    got = out_f32[:B, :n_output]
    assert got.shape == (B, n_output)
    assert jnp.allclose(got, ref, atol=1e-5, rtol=1e-5), "f32 mismatch vs reference"

    # default fast path: bf16 MXU operands, f32 accumulation & elementwise, f32 output
    prepped = prepare_params(params, n_input)
    out_bf16 = jax.block_until_ready(
        decoder_forward(z, cat_idx, prepped, h_true=n_hidden))
    got = out_bf16[:B, :n_output]
    assert got.shape == (B, n_output)
    assert jnp.allclose(got, ref, atol=3e-2, rtol=0.0), "bf16 mismatch vs reference"

    # optional bf16 output store (halves output HBM traffic when write-bound)
    out_bf16o = jax.block_until_ready(
        decoder_forward(z, cat_idx, prepped, h_true=n_hidden, out_dtype=jnp.bfloat16))
    got = out_bf16o[:B, :n_output].astype(jnp.float32)
    assert jnp.allclose(got, ref, atol=4e-2, rtol=0.0), "bf16-output mismatch vs reference"

    print("KERNEL_OK")
</pallas_src>

<mosaic_0001>
module attributes {stable_mosaic.version = 11 : i64} {
  func.func @decoder_kernel(%arg0: i32, %arg1: i32, %arg2: memref<8x16xf32, #tpu.memory_space<vmem>>, %arg3: memref<8x1xi32, #tpu.memory_space<vmem>>, %arg4: memref<16x128xf32, #tpu.memory_space<vmem>>, %arg5: memref<8x128xf32, #tpu.memory_space<vmem>>, %arg6: memref<1x128xf32, #tpu.memory_space<vmem>>, %arg7: memref<128x128xf32, #tpu.memory_space<vmem>>, %arg8: memref<1x128xf32, #tpu.memory_space<vmem>>, %arg9: memref<128x128xf32, #tpu.memory_space<vmem>>, %arg10: memref<1x128xf32, #tpu.memory_space<vmem>>, %arg11: memref<8x128xf32, #tpu.memory_space<vmem>>, %arg12: memref<8x128xf32, #tpu.memory_space<vmem>>) attributes {dimension_semantics = [#tpu.dimension_semantics<parallel>, #tpu.dimension_semantics<arbitrary>], iteration_bounds = array<i64: 2, 1>, scalar_prefetch = 0 : i64, scratch_operands = 1 : i64, tpu.core_type = #tpu.core_type<tc>, window_params = [{transform_indices = @transform_0, window_bounds = array<i64: 8, 16>}, {transform_indices = @transform_1, window_bounds = array<i64: 8, 1>}, {pipeline_mode = #tpu.pipeline_mode<synchronous>, transform_indices = @transform_2, window_bounds = array<i64: 16, 128>}, {pipeline_mode = #tpu.pipeline_mode<synchronous>, transform_indices = @transform_3, window_bounds = array<i64: 8, 128>}, {pipeline_mode = #tpu.pipeline_mode<synchronous>, transform_indices = @transform_4, window_bounds = array<i64: 1, 128>}, {pipeline_mode = #tpu.pipeline_mode<synchronous>, transform_indices = @transform_5, window_bounds = array<i64: 128, 128>}, {pipeline_mode = #tpu.pipeline_mode<synchronous>, transform_indices = @transform_6, window_bounds = array<i64: 1, 128>}, {transform_indices = @transform_7, window_bounds = array<i64: 128, 128>}, {transform_indices = @transform_8, window_bounds = array<i64: 1, 128>}, {transform_indices = @transform_9, window_bounds = array<i64: 8, 128>}]} {
    %c0_i32 = arith.constant 0 : i32
    %0 = arith.cmpi eq, %arg1, %c0_i32 : i32
    %1 = arith.extui %0 : i1 to i32
    %c0_i32_0 = arith.constant 0 : i32
    %2 = arith.cmpi ne, %1, %c0_i32_0 : i32
    scf.if %2 {
      %15 = tpu.iota {dimensions = array<i32: 1>} : vector<1x128xi32>
      %c32_i32 = arith.constant 32 : i32
      %16 = vector.broadcast %c32_i32 : i32 to vector<1x128xi32>
      %17 = arith.cmpi slt, %15, %16 : vector<1x128xi32>
      %18 = arith.extui %17 : vector<1x128xi1> to vector<1x128xi32>
      %19 = arith.sitofp %18 : vector<1x128xi32> to vector<1x128xf32>
      %c0_9 = arith.constant 0 : index
      %c0_10 = arith.constant 0 : index
      %20 = vector.load %arg2[%c0_9, %c0_10] : memref<8x16xf32, #tpu.memory_space<vmem>>, vector<8x16xf32>
      %c0_11 = arith.constant 0 : index
      %c0_12 = arith.constant 0 : index
      %21 = vector.load %arg4[%c0_11, %c0_12] : memref<16x128xf32, #tpu.memory_space<vmem>>, vector<16x128xf32>
      %cst_13 = arith.constant dense<0.000000e+00> : vector<8x128xf32>
      %22 = tpu.matmul %20, %21, %cst_13 {dimension_numbers = #tpu.dot_dimension_numbers<[1], [0], [0], [1], [0, 0, 1, 1], [], []>} : vector<8x16xf32>, vector<16x128xf32>, vector<8x128xf32> -> vector<8x128xf32>
      %c0_14 = arith.constant 0 : index
      %c0_15 = arith.constant 0 : index
      %23 = vector.load %arg3[%c0_14, %c0_15] : memref<8x1xi32, #tpu.memory_space<vmem>>, vector<8x1xi32>
      %24 = tpu.iota {dimensions = array<i32: 1>} : vector<1x8xi32>
      %25 = vector.broadcast %23 : vector<8x1xi32> to vector<8x8xi32>
      %26 = vector.broadcast %24 : vector<1x8xi32> to vector<8x8xi32>
      %27 = arith.cmpi eq, %25, %26 : vector<8x8xi32>
      %28 = arith.extui %27 : vector<8x8xi1> to vector<8x8xi32>
      %29 = arith.sitofp %28 : vector<8x8xi32> to vector<8x8xf32>
      %c0_16 = arith.constant 0 : index
      %c0_17 = arith.constant 0 : index
      %30 = vector.load %arg5[%c0_16, %c0_17] : memref<8x128xf32, #tpu.memory_space<vmem>>, vector<8x128xf32>
      %cst_18 = arith.constant dense<0.000000e+00> : vector<8x128xf32>
      %31 = tpu.matmul %29, %30, %cst_18 {dimension_numbers = #tpu.dot_dimension_numbers<[1], [0], [0], [1], [0, 0, 1, 1], [], []>} : vector<8x8xf32>, vector<8x128xf32>, vector<8x128xf32> -> vector<8x128xf32>
      %32 = arith.addf %22, %31 : vector<8x128xf32>
      %c0_19 = arith.constant 0 : index
      %c0_20 = arith.constant 0 : index
      %33 = vector.load %arg6[%c0_19, %c0_20] : memref<1x128xf32, #tpu.memory_space<vmem>>, vector<1x128xf32>
      %34 = vector.broadcast %33 : vector<1x128xf32> to vector<8x128xf32>
      %35 = arith.addf %32, %34 : vector<8x128xf32>
      %cst_21 = arith.constant dense<0.000000e+00> : vector<8xf32>
      %36 = vector.multi_reduction <add>, %35, %cst_21 [1] : vector<8x128xf32> to vector<8xf32>
      %37 = vector.shape_cast %36 : vector<8xf32> to vector<8x1xf32>
      %cst_22 = arith.constant 3.125000e-02 : f32
      %38 = vector.broadcast %cst_22 : f32 to vector<8x1xf32>
      %39 = arith.mulf %37, %38 : vector<8x1xf32>
      %40 = vector.broadcast %39 : vector<8x1xf32> to vector<8x128xf32>
      %41 = arith.subf %35, %40 : vector<8x128xf32>
      %42 = vector.broadcast %19 : vector<1x128xf32> to vector<8x128xf32>
      %43 = arith.mulf %41, %42 : vector<8x128xf32>
      %44 = arith.mulf %43, %43 : vector<8x128xf32>
      %cst_23 = arith.constant dense<0.000000e+00> : vector<8xf32>
      %45 = vector.multi_reduction <add>, %44, %cst_23 [1] : vector<8x128xf32> to vector<8xf32>
      %46 = vector.shape_cast %45 : vector<8xf32> to vector<8x1xf32>
      %cst_24 = arith.constant 3.125000e-02 : f32
      %47 = vector.broadcast %cst_24 : f32 to vector<8x1xf32>
      %48 = arith.mulf %46, %47 : vector<8x1xf32>
      %49 = vector.broadcast %39 : vector<8x1xf32> to vector<8x128xf32>
      %50 = arith.subf %35, %49 : vector<8x128xf32>
      %cst_25 = arith.constant 9.99999974E-6 : f32
      %51 = vector.broadcast %cst_25 : f32 to vector<8x1xf32>
      %52 = arith.addf %48, %51 : vector<8x1xf32>
      %53 = math.rsqrt %52 : vector<8x1xf32>
      %54 = vector.broadcast %53 : vector<8x1xf32> to vector<8x128xf32>
      %55 = arith.mulf %50, %54 : vector<8x128xf32>
      %cst_26 = arith.constant 0.000000e+00 : f32
      %56 = vector.broadcast %cst_26 : f32 to vector<8x128xf32>
      %57 = arith.cmpf ogt, %55, %56 : vector<8x128xf32>
      %cst_27 = arith.constant 0.00999999977 : f32
      %58 = vector.broadcast %cst_27 : f32 to vector<8x128xf32>
      %59 = arith.mulf %58, %55 : vector<8x128xf32>
      %60 = arith.select %57, %55, %59 : vector<8x128xi1>, vector<8x128xf32>
      %c0_28 = arith.constant 0 : index
      %c0_29 = arith.constant 0 : index
      %61 = vector.load %arg7[%c0_28, %c0_29] : memref<128x128xf32, #tpu.memory_space<vmem>>, vector<128x128xf32>
      %cst_30 = arith.constant dense<0.000000e+00> : vector<8x128xf32>
      %62 = tpu.matmul %60, %61, %cst_30 {dimension_numbers = #tpu.dot_dimension_numbers<[1], [0], [0], [1], [0, 0, 1, 1], [], []>} : vector<8x128xf32>, vector<128x128xf32>, vector<8x128xf32> -> vector<8x128xf32>
      %c0_31 = arith.constant 0 : index
      %c0_32 = arith.constant 0 : index
      %63 = vector.load %arg8[%c0_31, %c0_32] : memref<1x128xf32, #tpu.memory_space<vmem>>, vector<1x128xf32>
      %64 = vector.broadcast %63 : vector<1x128xf32> to vector<8x128xf32>
      %65 = arith.addf %62, %64 : vector<8x128xf32>
      %cst_33 = arith.constant dense<0.000000e+00> : vector<8xf32>
      %66 = vector.multi_reduction <add>, %65, %cst_33 [1] : vector<8x128xf32> to vector<8xf32>
      %67 = vector.shape_cast %66 : vector<8xf32> to vector<8x1xf32>
      %cst_34 = arith.constant 3.125000e-02 : f32
      %68 = vector.broadcast %cst_34 : f32 to vector<8x1xf32>
      %69 = arith.mulf %67, %68 : vector<8x1xf32>
      %70 = vector.broadcast %69 : vector<8x1xf32> to vector<8x128xf32>
      %71 = arith.subf %65, %70 : vector<8x128xf32>
      %72 = vector.broadcast %19 : vector<1x128xf32> to vector<8x128xf32>
      %73 = arith.mulf %71, %72 : vector<8x128xf32>
      %74 = arith.mulf %73, %73 : vector<8x128xf32>
      %cst_35 = arith.constant dense<0.000000e+00> : vector<8xf32>
      %75 = vector.multi_reduction <add>, %74, %cst_35 [1] : vector<8x128xf32> to vector<8xf32>
      %76 = vector.shape_cast %75 : vector<8xf32> to vector<8x1xf32>
      %cst_36 = arith.constant 3.125000e-02 : f32
      %77 = vector.broadcast %cst_36 : f32 to vector<8x1xf32>
      %78 = arith.mulf %76, %77 : vector<8x1xf32>
      %79 = vector.broadcast %69 : vector<8x1xf32> to vector<8x128xf32>
      %80 = arith.subf %65, %79 : vector<8x128xf32>
      %cst_37 = arith.constant 9.99999974E-6 : f32
      %81 = vector.broadcast %cst_37 : f32 to vector<8x1xf32>
      %82 = arith.addf %78, %81 : vector<8x1xf32>
      %83 = math.rsqrt %82 : vector<8x1xf32>
      %84 = vector.broadcast %83 : vector<8x1xf32> to vector<8x128xf32>
      %85 = arith.mulf %80, %84 : vector<8x128xf32>
      %cst_38 = arith.constant 0.000000e+00 : f32
      %86 = vector.broadcast %cst_38 : f32 to vector<8x128xf32>
      %87 = arith.cmpf ogt, %85, %86 : vector<8x128xf32>
      %cst_39 = arith.constant 0.00999999977 : f32
      %88 = vector.broadcast %cst_39 : f32 to vector<8x128xf32>
      %89 = arith.mulf %88, %85 : vector<8x128xf32>
      %90 = arith.select %87, %85, %89 : vector<8x128xi1>, vector<8x128xf32>
      %c0_40 = arith.constant 0 : index
      %c0_41 = arith.constant 0 : index
      %91 = vector.load %arg12[%c0_40, %c0_41] : memref<8x128xf32, #tpu.memory_space<vmem>>, vector<8x128xf32>
      tpu.vector_store %arg12[%c0_40, %c0_41], %90 {strides = array<i32>} : memref<8x128xf32, #tpu.memory_space<vmem>>, vector<8x128xf32>,
    } else {
    }
    %c0 = arith.constant 0 : index
    %c0_1 = arith.constant 0 : index
    %3 = vector.load %arg12[%c0, %c0_1] : memref<8x128xf32, #tpu.memory_space<vmem>>, vector<8x128xf32>
    %c0_2 = arith.constant 0 : index
    %c0_3 = arith.constant 0 : index
    %4 = vector.load %arg9[%c0_2, %c0_3] : memref<128x128xf32, #tpu.memory_space<vmem>>, vector<128x128xf32>
    %cst = arith.constant dense<0.000000e+00> : vector<8x128xf32>
    %5 = tpu.matmul %3, %4, %cst {dimension_numbers = #tpu.dot_dimension_numbers<[1], [0], [0], [1], [0, 0, 1, 1], [], []>} : vector<8x128xf32>, vector<128x128xf32>, vector<8x128xf32> -> vector<8x128xf32>
    %c0_4 = arith.constant 0 : index
    %c0_5 = arith.constant 0 : index
    %6 = vector.load %arg10[%c0_4, %c0_5] : memref<1x128xf32, #tpu.memory_space<vmem>>, vector<1x128xf32>
    %7 = vector.broadcast %6 : vector<1x128xf32> to vector<8x128xf32>
    %8 = arith.addf %5, %7 : vector<8x128xf32>
    %9 = arith.negf %8 : vector<8x128xf32>
    %10 = math.exp %9 : vector<8x128xf32>
    %cst_6 = arith.constant 1.000000e+00 : f32
    %11 = vector.broadcast %cst_6 : f32 to vector<8x128xf32>
    %12 = arith.addf %11, %10 : vector<8x128xf32>
    %13 = arith.divf %11, %12 : vector<8x128xf32>
    %c0_7 = arith.constant 0 : index
    %c0_8 = arith.constant 0 : index
    %14 = vector.load %arg11[%c0_7, %c0_8] : memref<8x128xf32, #tpu.memory_space<vmem>>, vector<8x128xf32>
    tpu.vector_store %arg11[%c0_7, %c0_8], %13 {strides = array<i32>} : memref<8x128xf32, #tpu.memory_space<vmem>>, vector<8x128xf32>,
    return
  }
  func.func @transform_0(%arg0: i32, %arg1: i32) -> (i32, i32) {
    %c0_i32 = arith.constant 0 : i32
    %c0_i32_0 = arith.constant 0 : i32
    return %arg0, %c0_i32 : i32, i32
  }
  func.func @transform_1(%arg0: i32, %arg1: i32) -> (i32, i32) {
    %c0_i32 = arith.constant 0 : i32
    %c0_i32_0 = arith.constant 0 : i32
    return %arg0, %c0_i32 : i32, i32
  }
  func.func @transform_2(%arg0: i32, %arg1: i32) -> (i32, i32) {
    %c0_i32 = arith.constant 0 : i32
    %c0_i32_0 = arith.constant 0 : i32
    %c0_i32_1 = arith.constant 0 : i32
    return %c0_i32, %c0_i32_0 : i32, i32
  }
  func.func @transform_3(%arg0: i32, %arg1: i32) -> (i32, i32) {
    %c0_i32 = arith.constant 0 : i32
    %c0_i32_0 = arith.constant 0 : i32
    %c0_i32_1 = arith.constant 0 : i32
    return %c0_i32, %c0_i32_0 : i32, i32
  }
  func.func @transform_4(%arg0: i32, %arg1: i32) -> (i32, i32) {
    %c0_i32 = arith.constant 0 : i32
    %c0_i32_0 = arith.constant 0 : i32
    %c0_i32_1 = arith.constant 0 : i32
    return %c0_i32, %c0_i32_0 : i32, i32
  }
  func.func @transform_5(%arg0: i32, %arg1: i32) -> (i32, i32) {
    %c0_i32 = arith.constant 0 : i32
    %c0_i32_0 = arith.constant 0 : i32
    %c0_i32_1 = arith.constant 0 : i32
    return %c0_i32, %c0_i32_0 : i32, i32
  }
  func.func @transform_6(%arg0: i32, %arg1: i32) -> (i32, i32) {
    %c0_i32 = arith.constant 0 : i32
    %c0_i32_0 = arith.constant 0 : i32
    %c0_i32_1 = arith.constant 0 : i32
    return %c0_i32, %c0_i32_0 : i32, i32
  }
  func.func @transform_7(%arg0: i32, %arg1: i32) -> (i32, i32) {
    %c0_i32 = arith.constant 0 : i32
    %c0_i32_0 = arith.constant 0 : i32
    return %c0_i32, %arg1 : i32, i32
  }
  func.func @transform_8(%arg0: i32, %arg1: i32) -> (i32, i32) {
    %c0_i32 = arith.constant 0 : i32
    %c0_i32_0 = arith.constant 0 : i32
    return %c0_i32, %arg1 : i32, i32
  }
  func.func @transform_9(%arg0: i32, %arg1: i32) -> (i32, i32) {
    %c0_i32 = arith.constant 0 : i32
    return %arg0, %arg1 : i32, i32
  }
}

</mosaic_0001>

<llo_original>
// kernel: decoder_forward.1
$region0: #{decoder_forward.1}
  #allocation0 [shape = 'u32[]', space=smem, size = 0x4, offset = 0x4, fixed_abs, tag = 'smem constant byte address 0x4 - core index']
  #allocation1 [shape = 'u32[144,128]{1,0:T(1,128)}', space=vmem, size = 0x12000, scoped, tag = 'internal scratch']
  #allocation2 [shape = 'f32[8,128]{1,0:T(8,128)}', space=vmem, size = 0x1000, scoped, tag = 'scratch operand']
  %s0 = inlined_call_operand.vmem [shape: f32[16,16], index: 0, kind: input, shape index: {}]
  %s1 = inlined_call_operand.vmem [shape: s32[16,1], index: 1, kind: input, shape index: {}]
  %s2 = inlined_call_operand.vmem [shape: f32[16,128], index: 2, kind: input, shape index: {}]
  %s3 = inlined_call_operand.vmem [shape: f32[8,128], index: 3, kind: input, shape index: {}]
  %s4 = inlined_call_operand.vmem [shape: f32[1,128], index: 4, kind: input, shape index: {}]
  %s5 = inlined_call_operand.hbm [shape: f32[128,128], index: 5, kind: input, shape index: {}]
  %s6 = inlined_call_operand.vmem [shape: f32[1,128], index: 6, kind: input, shape index: {}]
  %s7 = inlined_call_operand.hbm [shape: f32[128,128], index: 7, kind: input, shape index: {}]
  %s8 = inlined_call_operand.vmem [shape: f32[1,128], index: 8, kind: input, shape index: {}]
  %s9 = inlined_call_operand.hbm [shape: f32[16,128], index: 9, kind: output, shape index: {}]
  %s10 = sld [smem:[#allocation0]]
  $region81: #{decoder_forward.1} parent=0
    _
  %s12 = ssub.s32 1, %s10
  %s13 = scalar_select 0, %s12, %s10
  $region1: #{decoder_forward.1} parent=0
    #allocation3 [shape = 'u8[65536]{0}', space=vmem, size = 0x10000, scoped, tag = 'input window, operand 5, single buffered']
    #allocation4 [shape = 's32[2]{0}', space=sflag, size = 0x8, scoped, tag = 'scoped memory for decoder_forward.1']
    #allocation5 [shape = 's32[2]{0}', space=sflag, size = 0x8, scoped, tag = 'scoped memory for decoder_forward.1']
    #allocation6 [shape = 'u8[65536]{0}', space=vmem, size = 0x10000, scoped, tag = 'input window, operand 7, single buffered']
    #allocation7 [shape = 's32[1]{0}', space=sflag, size = 0x4, scoped, tag = 'scoped memory for decoder_forward.1']
    #allocation8 [shape = 'u8[8192]{0}', space=vmem, size = 0x2000, scoped, tag = 'output window, operand 0']
    %14 = vsyncpa [#allocation4], 0
    %15 = vsyncpa [#allocation7], 0
    %16 = vsyncpa [#allocation5], 0
    %s17 = scalar_lea.sflag [#allocation5], 1
    %18 = vsyncpa %s17, 0
    loop: start=0, step=1, limit=4
    $region2: #{decoder_forward.1} parent=1 // loop_pre_header
      _
    $region3: #{decoder_forward.1} parent=1 // loop_header
      %s20 = sphi 0, %s24
      %p21 = scmp.ge.s32.totalorder %s20, 4
      %s27 = sphi 0, %s39
      %s28 = sphi 0, %s35
      %s29 = sphi 0, %s27
      %s30 = sphi 0, %s28
      %s31 = sphi 0, %s29
      %s32 = sphi 0, %s30
      %s42 = sphi 0, %s44
      %s45 = sphi 0, %s42
      %s46 = sphi 0, %s45
      %s62 = sphi 0, %s46
      %s68 = sphi 0, %s70
      %s71 = sphi 0, %s68
      %s72 = sphi 0, %s71
      %s88 = sphi 0, %s72
      %s92 = sphi 0, %s92
      %s94 = sphi 0, %s92
      %s95 = sphi 0, %s94
      %s109 = sphi 0, %s95
      %s113 = sphi 0, %s113
      %s115 = sphi 0, %s113
      %s116 = sphi 0, %s115
      %s130 = sphi 0, %s116
      %s134 = sphi 0, %s134
      %s136 = sphi 0, %s134
      %s137 = sphi 0, %s136
      %s151 = sphi 0, %s137
      %s155 = sphi 0, %s155
      %s157 = sphi 0, %s155
      %s158 = sphi 0, %s157
      %s172 = sphi 0, %s158
      %s176 = sphi 0, %s176
      %s178 = sphi 0, %s176
      %s179 = sphi 0, %s178
      %s193 = sphi 0, %s179
      %s199 = sphi 0, %s201
      %s202 = sphi 0, %s199
      %s203 = sphi 0, %s202
      %s219 = sphi 0, %s203
      %s225 = sphi 0, %s227
      %s228 = sphi 0, %s225
      %s229 = sphi 0, %s228
      %s245 = sphi 0, %s229
      %s253 = sphi 0, %s255
      %s256 = sphi 0, %s253
      %s257 = sphi 0, %s256
      %s273 = sphi 0, %s257
    $region4: #{decoder_forward.1} parent=1 // loop_header_branch
      %23 = sbr.rel (%p21) target = $region8
    $region5: #{decoder_forward.1} parent=1 // loop_body
      %s25 = ssub.s32 %s20, 1
      %s26 = ssub.s32 %s20, 2
      %s33 = sadd.s32 1, %s28
      %p34 = scmp.ge.s32.totalorder %s33, 1
      %s35 = scalar_select %p34, 0, %s33
      %s36 = sadd.s32 1, %s27
      %s37 = scalar_select %p34, %s36, %s27
      %p38 = scmp.ge.s32.totalorder %s37, 2
      %s39 = scalar_select %p38, 0, %s37
      %s40 = ssub.s32 %s27, %s39
      %p41 = scmp.eq.s32.totalorder %s40, 0
      %s43 = sadd.s32 %s42, 1
      %s44 = scalar_select %p41, %s42, %s43
      %p47 = pneg %p41
      %p48 = scmp.eq.s32.totalorder %s20, 1
      %p49 = por %p47, %p48
      %p50 = scmp.ne.s32.totalorder %s42, %s45
      %p51 = scmp.eq.s32.totalorder %s20, 0
      %p52 = por %p50, %p51
      %p53 = scmp.ne.s32.totalorder %s42, %s45
      %p54 = scmp.eq.s32.totalorder %s25, 1
      %p55 = por %p53, %p54
      %p56 = scmp.ne.s32.totalorder %s45, %s46
      %p57 = scmp.eq.s32.totalorder %s25, 0
      %p58 = por %p56, %p57
      %p59 = scmp.ne.s32.totalorder %s45, %s46
      %p60 = scmp.eq.s32.totalorder %s26, 1
      %p61 = por %p59, %p60
      %p63 = scmp.ne.s32.totalorder %s46, %s62
      %p64 = scmp.eq.s32.totalorder %s26, 0
      %p65 = por %p63, %p64
      %s66 = ssub.s32 %s27, %s39
      %p67 = scmp.eq.s32.totalorder %s66, 0
      %s69 = sadd.s32 %s68, 1
      %s70 = scalar_select %p67, %s68, %s69
      %p73 = pneg %p67
      %p74 = scmp.eq.s32.totalorder %s20, 1
      %p75 = por %p73, %p74
      %p76 = scmp.ne.s32.totalorder %s68, %s71
      %p77 = scmp.eq.s32.totalorder %s20, 0
      %p78 = por %p76, %p77
      %p79 = scmp.ne.s32.totalorder %s68, %s71
      %p80 = scmp.eq.s32.totalorder %s25, 1
      %p81 = por %p79, %p80
      %p82 = scmp.ne.s32.totalorder %s71, %s72
      %p83 = scmp.eq.s32.totalorder %s25, 0
      %p84 = por %p82, %p83
      %p85 = scmp.ne.s32.totalorder %s71, %s72
      %p86 = scmp.eq.s32.totalorder %s26, 1
      %p87 = por %p85, %p86
      %p89 = scmp.ne.s32.totalorder %s72, %s88
      %p90 = scmp.eq.s32.totalorder %s26, 0
      %p91 = por %p89, %p90
      %s93 = sadd.s32 %s92, 1
      %p96 = scmp.eq.s32.totalorder %s20, 1
      %p97 = scmp.ne.s32.totalorder %s92, %s94
      %p98 = scmp.eq.s32.totalorder %s20, 0
      %p99 = por %p97, %p98
      %p100 = scmp.ne.s32.totalorder %s92, %s94
      %p101 = scmp.eq.s32.totalorder %s25, 1
      %p102 = por %p100, %p101
      %p103 = scmp.ne.s32.totalorder %s94, %s95
      %p104 = scmp.eq.s32.totalorder %s25, 0
      %p105 = por %p103, %p104
      %p106 = scmp.ne.s32.totalorder %s94, %s95
      %p107 = scmp.eq.s32.totalorder %s26, 1
      %p108 = por %p106, %p107
      %p110 = scmp.ne.s32.totalorder %s95, %s109
      %p111 = scmp.eq.s32.totalorder %s26, 0
      %p112 = por %p110, %p111
      %s114 = sadd.s32 %s113, 1
      %p117 = scmp.eq.s32.totalorder %s20, 1
      %p118 = scmp.ne.s32.totalorder %s113, %s115
      %p119 = scmp.eq.s32.totalorder %s20, 0
      %p120 = por %p118, %p119
      %p121 = scmp.ne.s32.totalorder %s113, %s115
      %p122 = scmp.eq.s32.totalorder %s25, 1
      %p123 = por %p121, %p122
      %p124 = scmp.ne.s32.totalorder %s115, %s116
      %p125 = scmp.eq.s32.totalorder %s25, 0
      %p126 = por %p124, %p125
      %p127 = scmp.ne.s32.totalorder %s115, %s116
      %p128 = scmp.eq.s32.totalorder %s26, 1
      %p129 = por %p127, %p128
      %p131 = scmp.ne.s32.totalorder %s116, %s130
      %p132 = scmp.eq.s32.totalorder %s26, 0
      %p133 = por %p131, %p132
      %s135 = sadd.s32 %s134, 1
      %p138 = scmp.eq.s32.totalorder %s20, 1
      %p139 = scmp.ne.s32.totalorder %s134, %s136
      %p140 = scmp.eq.s32.totalorder %s20, 0
      %p141 = por %p139, %p140
      %p142 = scmp.ne.s32.totalorder %s134, %s136
      %p143 = scmp.eq.s32.totalorder %s25, 1
      %p144 = por %p142, %p143
      %p145 = scmp.ne.s32.totalorder %s136, %s137
      %p146 = scmp.eq.s32.totalorder %s25, 0
      %p147 = por %p145, %p146
      %p148 = scmp.ne.s32.totalorder %s136, %s137
      %p149 = scmp.eq.s32.totalorder %s26, 1
      %p150 = por %p148, %p149
      %p152 = scmp.ne.s32.totalorder %s137, %s151
      %p153 = scmp.eq.s32.totalorder %s26, 0
      %p154 = por %p152, %p153
      %s156 = sadd.s32 %s155, 1
      %p159 = scmp.eq.s32.totalorder %s20, 1
      %p160 = scmp.ne.s32.totalorder %s155, %s157
      %p161 = scmp.eq.s32.totalorder %s20, 0
      %p162 = por %p160, %p161
      %p163 = scmp.ne.s32.totalorder %s155, %s157
      %p164 = scmp.eq.s32.totalorder %s25, 1
      %p165 = por %p163, %p164
      %p166 = scmp.ne.s32.totalorder %s157, %s158
      %p167 = scmp.eq.s32.totalorder %s25, 0
      %p168 = por %p166, %p167
      %p169 = scmp.ne.s32.totalorder %s157, %s158
      %p170 = scmp.eq.s32.totalorder %s26, 1
      %p171 = por %p169, %p170
      %p173 = scmp.ne.s32.totalorder %s158, %s172
      %p174 = scmp.eq.s32.totalorder %s26, 0
      %p175 = por %p173, %p174
      %s177 = sadd.s32 %s176, 1
      %p180 = scmp.eq.s32.totalorder %s20, 1
      %p181 = scmp.ne.s32.totalorder %s176, %s178
      %p182 = scmp.eq.s32.totalorder %s20, 0
      %p183 = por %p181, %p182
      %p184 = scmp.ne.s32.totalorder %s176, %s178
      %p185 = scmp.eq.s32.totalorder %s25, 1
      %p186 = por %p184, %p185
      %p187 = scmp.ne.s32.totalorder %s178, %s179
      %p188 = scmp.eq.s32.totalorder %s25, 0
      %p189 = por %p187, %p188
      %p190 = scmp.ne.s32.totalorder %s178, %s179
      %p191 = scmp.eq.s32.totalorder %s26, 1
      %p192 = por %p190, %p191
      %p194 = scmp.ne.s32.totalorder %s179, %s193
      %p195 = scmp.eq.s32.totalorder %s26, 0
      %p196 = por %p194, %p195
      %s197 = ssub.s32 %s28, %s35
      %p198 = scmp.eq.s32.totalorder %s197, 0
      %s200 = sadd.s32 %s199, 1
      %s201 = scalar_select %p198, %s199, %s200
      %p204 = pneg %p198
      %p205 = scmp.eq.s32.totalorder %s20, 1
      %p206 = por %p204, %p205
      %p207 = scmp.ne.s32.totalorder %s199, %s202
      %p208 = scmp.eq.s32.totalorder %s20, 0
      %p209 = por %p207, %p208
      %p210 = scmp.ne.s32.totalorder %s199, %s202
      %p211 = scmp.eq.s32.totalorder %s25, 1
      %p212 = por %p210, %p211
      %p213 = scmp.ne.s32.totalorder %s202, %s203
      %p214 = scmp.eq.s32.totalorder %s25, 0
      %p215 = por %p213, %p214
      %p216 = scmp.ne.s32.totalorder %s202, %s203
      %p217 = scmp.eq.s32.totalorder %s26, 1
      %p218 = por %p216, %p217
      %p220 = scmp.ne.s32.totalorder %s203, %s219
      %p221 = scmp.eq.s32.totalorder %s26, 0
      %p222 = por %p220, %p221
      %s223 = ssub.s32 %s28, %s35
      %p224 = scmp.eq.s32.totalorder %s223, 0
      %s226 = sadd.s32 %s225, 1
      %s227 = scalar_select %p224, %s225, %s226
      %p230 = pneg %p224
      %p231 = scmp.eq.s32.totalorder %s20, 1
      %p232 = por %p230, %p231
      %p233 = scmp.ne.s32.totalorder %s225, %s228
      %p234 = scmp.eq.s32.totalorder %s20, 0
      %p235 = por %p233, %p234
      %p236 = scmp.ne.s32.totalorder %s225, %s228
      %p237 = scmp.eq.s32.totalorder %s25, 1
      %p238 = por %p236, %p237
      %p239 = scmp.ne.s32.totalorder %s228, %s229
      %p240 = scmp.eq.s32.totalorder %s25, 0
      %p241 = por %p239, %p240
      %p242 = scmp.ne.s32.totalorder %s228, %s229
      %p243 = scmp.eq.s32.totalorder %s26, 1
      %p244 = por %p242, %p243
      %p246 = scmp.ne.s32.totalorder %s229, %s245
      %p247 = scmp.eq.s32.totalorder %s26, 0
      %p248 = por %p246, %p247
      %s249 = ssub.s32 %s27, %s39
      %s250 = ssub.s32 %s28, %s35
      %s251 = sor.u32 %s249, %s250
      %p252 = scmp.eq.s32.totalorder %s251, 0
      %s254 = sadd.s32 %s253, 1
      %s255 = scalar_select %p252, %s253, %s254
      %p258 = pneg %p252
      %p259 = scmp.eq.s32.totalorder %s20, 1
      %p260 = por %p258, %p259
      %p261 = scmp.ne.s32.totalorder %s253, %s256
      %p262 = scmp.eq.s32.totalorder %s20, 0
      %p263 = por %p261, %p262
      %p264 = scmp.ne.s32.totalorder %s253, %s256
      %p265 = scmp.eq.s32.totalorder %s25, 1
      %p266 = por %p264, %p265
      %p267 = scmp.ne.s32.totalorder %s256, %s257
      %p268 = scmp.eq.s32.totalorder %s25, 0
      %p269 = por %p267, %p268
      %p270 = scmp.ne.s32.totalorder %s256, %s257
      %p271 = scmp.eq.s32.totalorder %s26, 1
      %p272 = por %p270, %p271
      %p274 = scmp.ne.s32.totalorder %s257, %s273
      %p275 = scmp.eq.s32.totalorder %s26, 0
      %p276 = por %p274, %p275
      %p277 = scmp.le.s32.totalorder 1, %s20
      %p278 = scmp.lt.s32.totalorder %s20, 3
      %p279 = pnand %p277, %p278
      %p280 = pneg %p279
      // Predicated region
      $region9: #{decoder_forward.1} parent=5 // pred_check
        _
      $region10: #{decoder_forward.1} parent=5 // pred_check_branch
        %282 = sbr.rel (%p279) target = $region12
      $region11: #{decoder_forward.1} parent=5 // pred_region
        %s283 = ssub.s32 %s20, 1
        // Predicated region
        $region13: #{decoder_forward.1} parent=11 // pred_check
          %p284 = pneg %p105
        $region14: #{decoder_forward.1} parent=11 // pred_check_branch
          %286 = sbr.rel (%p284) target = $region16
        $region15: #{decoder_forward.1} parent=11 // pred_region
          _
        $region16: #{decoder_forward.1} parent=11 // pred_fallthru
          _
        // Predicated region
        $region17: #{decoder_forward.1} parent=11 // pred_check
          %p287 = pneg %p126
        $region18: #{decoder_forward.1} parent=11 // pred_check_branch
          %289 = sbr.rel (%p287) target = $region20
        $region19: #{decoder_forward.1} parent=11 // pred_region
          _
        $region20: #{decoder_forward.1} parent=11 // pred_fallthru
          _
        // Predicated region
        $region21: #{decoder_forward.1} parent=11 // pred_check
          %p290 = pneg %p147
        $region22: #{decoder_forward.1} parent=11 // pred_check_branch
          %292 = sbr.rel (%p290) target = $region24
        $region23: #{decoder_forward.1} parent=11 // pred_region
          _
        $region24: #{decoder_forward.1} parent=11 // pred_fallthru
          _
        // Predicated region
        $region25: #{decoder_forward.1} parent=11 // pred_check
          %p293 = pneg %p168
        $region26: #{decoder_forward.1} parent=11 // pred_check_branch
          %295 = sbr.rel (%p293) target = $region28
        $region27: #{decoder_forward.1} parent=11 // pred_region
          %s297 = ssub.s32 2048, 2048
          %298 = vsyncadd [#allocation4], %s297
          %s299 = sshll.u32 [#allocation3], 4
          %s300 = int_to_ptr.vmem [resolvable:$true] %s299
          %305 = dma.hbm_to_vmem [thread:$0]  %s5, 2048, %s300, [#allocation4], 128, 128, 8
        $region28: #{decoder_forward.1} parent=11 // pred_fallthru
          _
        // Predicated region
        $region29: #{decoder_forward.1} parent=11 // pred_check
          %p306 = pneg %p189
        $region30: #{decoder_forward.1} parent=11 // pred_check_branch
          %308 = sbr.rel (%p306) target = $region32
        $region31: #{decoder_forward.1} parent=11 // pred_region
          _
        $region32: #{decoder_forward.1} parent=11 // pred_fallthru
          _
        // Predicated region
        $region33: #{decoder_forward.1} parent=11 // pred_check
          %p309 = pneg %p215
        $region34: #{decoder_forward.1} parent=11 // pred_check_branch
          %311 = sbr.rel (%p309) target = $region36
        $region35: #{decoder_forward.1} parent=11 // pred_region
          %s313 = ssub.s32 2048, 2048
          %314 = vsyncadd [#allocation7], %s313
          %s315 = smul.addr %s30, 128
          %s316 = scalar_lea.hbm %s7, %s315
          %s317 = sshll.u32 [#allocation6], 4
          %s318 = int_to_ptr.vmem [resolvable:$true] %s317
          %323 = dma.hbm_to_vmem [thread:$0]  %s316, 2048, %s318, [#allocation7], 128, 128, 8
        $region36: #{decoder_forward.1} parent=11 // pred_fallthru
          _
        // Predicated region
        $region37: #{decoder_forward.1} parent=11 // pred_check
          %p324 = pneg %p241
        $region38: #{decoder_forward.1} parent=11 // pred_check_branch
          %326 = sbr.rel (%p324) target = $region40
        $region39: #{decoder_forward.1} parent=11 // pred_region
          %p327 = scmp.lt.s32.totalorder %s30, 0
          %s328 = scalar_select %p327, %s30, 0
          %s329 = scalar_lea.vmem %s8, %s328
        $region40: #{decoder_forward.1} parent=11 // pred_fallthru
          _
      $region12: #{decoder_forward.1} parent=5 // pred_fallthru
        _
      %p330 = scmp.lt.s32.totalorder %s20, 2
      // Predicated region
      $region41: #{decoder_forward.1} parent=5 // pred_check
        %p331 = pneg %p330
      $region42: #{decoder_forward.1} parent=5 // pred_check_branch
        %333 = sbr.rel (%p331) target = $region44
      $region43: #{decoder_forward.1} parent=5 // pred_region
        // Predicated region
        $region45: #{decoder_forward.1} parent=43 // pred_check
          %p334 = pneg %p52
        $region46: #{decoder_forward.1} parent=43 // pred_check_branch
          %336 = sbr.rel (%p334) target = $region48
        $region47: #{decoder_forward.1} parent=43 // pred_region
          %p337 = scmp.lt.s32.totalorder %s27, 1
          %s338 = scalar_select %p337, %s27, 1
          %s339 = smul.addr %s338, 8
          %s340 = scalar_lea.vmem %s0, %s339
        $region48: #{decoder_forward.1} parent=43 // pred_fallthru
          _
        // Predicated region
        $region49: #{decoder_forward.1} parent=43 // pred_check
          %p341 = pneg %p78
        $region50: #{decoder_forward.1} parent=43 // pred_check_branch
          %343 = sbr.rel (%p341) target = $region52
        $region51: #{decoder_forward.1} parent=43 // pred_region
          %p344 = scmp.lt.s32.totalorder %s27, 1
          %s345 = scalar_select %p344, %s27, 1
          %s346 = smul.addr %s345, 8
          %s347 = scalar_lea.vmem %s1, %s346
        $region52: #{decoder_forward.1} parent=43 // pred_fallthru
          _
      $region44: #{decoder_forward.1} parent=5 // pred_fallthru
        _
      %p348 = scmp.le.s32.totalorder 1, %s20
      %p349 = scmp.lt.s32.totalorder %s20, 3
      %p350 = pnand %p348, %p349
      %p351 = pneg %p350
      // Predicated region
      $region53: #{decoder_forward.1} parent=5 // pred_check
        _
      $region54: #{decoder_forward.1} parent=5 // pred_check_branch
        %353 = sbr.rel (%p350) target = $region56
      $region55: #{decoder_forward.1} parent=5 // pred_region
        %s354 = ssub.s32 %s20, 1
        // Predicated region
        $region57: #{decoder_forward.1} parent=55 // pred_check
          %p355 = pneg %p168
        $region58: #{decoder_forward.1} parent=55 // pred_check_branch
          %357 = sbr.rel (%p355) target = $region60
        $region59: #{decoder_forward.1} parent=55 // pred_region
          %358 = dma.done [#allocation4], 2048
        $region60: #{decoder_forward.1} parent=55 // pred_fallthru
          _
        // Predicated region
        $region61: #{decoder_forward.1} parent=55 // pred_check
          %p359 = pneg %p215
        $region62: #{decoder_forward.1} parent=55 // pred_check_branch
          %361 = sbr.rel (%p359) target = $region64
        $region63: #{decoder_forward.1} parent=55 // pred_region
          %362 = dma.done [#allocation7], 2048
        $region64: #{decoder_forward.1} parent=55 // pred_fallthru
          _
        %p363 = scmp.lt.s32.totalorder %s29, 1
        %s364 = scalar_select %p363, %s29, 1
        %s365 = smul.addr %s364, 8
        %s366 = scalar_lea.vmem %s0, %s365
        %p367 = pneg %p58
        %p368 = pneg %p55
        %p369 = scmp.lt.s32.totalorder %s29, 1
        %s370 = scalar_select %p369, %s29, 1
        %s371 = smul.addr %s370, 8
        %s372 = scalar_lea.vmem %s1, %s371
        %p373 = pneg %p84
        %p374 = pneg %p81
        %p375 = pneg %p105
        %p376 = pneg %p102
        %p377 = pneg %p126
        %p378 = pneg %p123
        %p379 = pneg %p147
        %p380 = pneg %p144
        %p381 = pneg %p168
        %p382 = pneg %p165
        %p383 = pneg %p189
        %p384 = pneg %p186
        %p385 = pneg %p215
        %p386 = pneg %p212
        %p387 = scmp.lt.s32.totalorder %s30, 0
        %s388 = scalar_select %p387, %s30, 0
        %s389 = scalar_lea.vmem %s8, %s388
        %p390 = pneg %p241
        %p391 = pneg %p238
        %p392 = pneg %p269
        %p393 = pneg %p266
        %s394 = sand.u32 %s256, 1
        %s395 = scalar_lea.sflag [#allocation5], %s394
        %s396 = sand.u32 %s256, 1
        %s397 = smul.addr %s396, 8
        %s398 = scalar_lea.vmem [#allocation8], %s397
        %p399 = scmp.lt.s32.totalorder %s29, 1
        %s400 = scalar_select %p399, %s29, 1
        %s401 = smul.addr %s400, 8
        %s402 = scalar_lea.vmem %s0, %s401
        %p403 = scmp.lt.s32.totalorder %s29, 1
        %s404 = scalar_select %p403, %s29, 1
        %s405 = smul.addr %s404, 8
        %s406 = scalar_lea.vmem %s1, %s405
        %p407 = scmp.lt.s32.totalorder %s30, 0
        %s408 = scalar_select %p407, %s30, 0
        %s409 = scalar_lea.vmem %s8, %s408
        %p410 = scmp.eq.s32.totalorder %s30, 0
        // Predicated region
        $region65: #{decoder_forward.1} parent=55 // pred_check
          %p411 = pneg %p410
        $region66: #{decoder_forward.1} parent=55 // pred_check_branch
          %413 = sbr.rel (%p411) target = $region68
        $region67: #{decoder_forward.1} parent=55 // pred_region
          %v414 = vlaneseq
          %v415 = vand.u32 %v414, 127
          %vm416 = vcmp.lt.s32.totalorder %v415, 32
          %v417 = vsel %vm416, 1, 0
          %v418 = vcvt.s32.f32 %v417
          %v419 = vld [vmem:[%s402] sm:$0xff]
          %v420 = vld [vmem:[%s2] sm:$0xff]
          %v421 = vld [vmem:[%s2 + $0x8] sm:$0xff]
          %v422 = vld [vmem:[%s406] sm:$0xff]
          %423 = vset.pattern.permute.xlu0 0
          %424 = vperm.xlu0 %423, %v422
          %v425 = vpop.permute.xlu0 %424
          %vm426 = vcmp.eq.s32.totalorder %v425, %v415
          %v427 = vsel %vm426, 1, 0
          %v428 = vcvt.s32.f32 %v427
          %v429 = vld [vmem:[%s3] sm:$0xff]
          %vm430 = vcmask 64512
          %v432 = vsel %vm430, %v428, 0
          %434 = vmatprep.subr.mxu0 0.0
          %435 = vmatpush1.msra.mxu0 0.0
          %436 = vmatprep.subr.mxu0 0.0
          %437 = vmatpush1.msra.mxu0 0.0
          %438 = vmatprep.subr.mxu0 0.0
          %439 = vmatpush1.msra.mxu0 0.0
          %440 = vmatprep.subr.mxu0 0.0
          %441 = vmatpush1.msra.mxu0 0.0
          %442 = vmatprep.subr.mxu0 0.0
          %443 = vmatpush1.msra.mxu0 0.0
          %444 = vmatprep.subr.mxu0 0.0
          %445 = vmatpush1.msra.mxu0 0.0
          %446 = vmatprep.subr.mxu0 0.0
          %447 = vmatpush1.msra.mxu0 0.0
          %448 = vmatprep.subr.mxu0 0.0
          %449 = vmatpush1.msra.mxu0 0.0
          %450 = vmatprep.subr.mxu0 0.0
          %451 = vmatpush1.msra.mxu0 0.0
          %452 = vmatprep.subr.mxu0 0.0
          %453 = vmatpush1.msra.mxu0 0.0
          %454 = vmatprep.subr.mxu0 0.0
          %455 = vmatpush1.msra.mxu0 0.0
          %456 = vmatprep.subr.mxu0 0.0
          %457 = vmatpush1.msra.mxu0 0.0
          %458 = vmatprep.subr.mxu0 0.0
          %459 = vmatpush1.msra.mxu0 0.0
          %460 = vmatprep.subr.mxu0 0.0
          %461 = vmatpush1.msra.mxu0 0.0
          %462 = vmatprep.subr.mxu0 0.0
          %463 = vmatpush1.msra.mxu0 0.0
          %464 = vmatprep.subr.mxu0 0.0
          %465 = vmatpush1.msra.mxu0 %v429
          %466 = vmatprep.subr.mxu0 0.0
          %467 = vmatpush2.msra.mxu0 0.0
          %468 = vmatprep.subr.mxu0 0.0
          %469 = vmatpush2.msra.mxu0 0.0
          %470 = vmatprep.subr.mxu0 0.0
          %471 = vmatpush2.msra.mxu0 0.0
          %472 = vmatprep.subr.mxu0 0.0
          %473 = vmatpush2.msra.mxu0 0.0
          %474 = vmatprep.subr.mxu0 0.0
          %475 = vmatpush2.msra.mxu0 0.0
          %476 = vmatprep.subr.mxu0 0.0
          %477 = vmatpush2.msra.mxu0 0.0
          %478 = vmatprep.subr.mxu0 0.0
          %479 = vmatpush2.msra.mxu0 0.0
          %480 = vmatprep.subr.mxu0 0.0
          %481 = vmatpush2.msra.mxu0 0.0
          %482 = vmatprep.subr.mxu0 0.0
          %483 = vmatpush2.msra.mxu0 0.0
          %484 = vmatprep.subr.mxu0 0.0
          %485 = vmatpush2.msra.mxu0 0.0
          %486 = vmatprep.subr.mxu0 0.0
          %487 = vmatpush2.msra.mxu0 0.0
          %488 = vmatprep.subr.mxu0 0.0
          %489 = vmatpush2.msra.mxu0 0.0
          %490 = vmatprep.subr.mxu0 0.0
          %491 = vmatpush2.msra.mxu0 0.0
          %492 = vmatprep.subr.mxu0 0.0
          %493 = vmatpush2.msra.mxu0 0.0
          %494 = vmatprep.subr.mxu0 0.0
          %495 = vmatpush2.msra.mxu0 0.0
          %496 = vmatprep.subr.mxu0 0.0
          %497 = vmatpush2.msra.mxu0 0.0
          %498 = vmatprep.mubr.f32.mxu0 0.0
          %499 = vmatmul.mubr.f32.gmra.mxu0 %v432
          %v500 = vpop.f32.mrf.mxu0
          %v501 = vadd.f32 0.0, %v500
          %v502 = vpop.f32.mrf.mxu0
          %503 = vdwg.mxu0
          %vm504 = vcmask 130048
          %v506 = vsel %vm504, %v419, 0
          %508 = vmatprep.subr.mxu0 0.0
          %509 = vmatpush1.msra.mxu0 0.0
          %510 = vmatprep.subr.mxu0 0.0
          %511 = vmatpush1.msra.mxu0 0.0
          %512 = vmatprep.subr.mxu0 0.0
          %513 = vmatpush1.msra.mxu0 0.0
          %514 = vmatprep.subr.mxu0 0.0
          %515 = vmatpush1.msra.mxu0 0.0
          %516 = vmatprep.subr.mxu0 0.0
          %517 = vmatpush1.msra.mxu0 0.0
          %518 = vmatprep.subr.mxu0 0.0
          %519 = vmatpush1.msra.mxu0 0.0
          %520 = vmatprep.subr.mxu0 0.0
          %521 = vmatpush1.msra.mxu0 0.0
          %522 = vmatprep.subr.mxu0 0.0
          %523 = vmatpush1.msra.mxu0 0.0
          %524 = vmatprep.subr.mxu0 0.0
          %525 = vmatpush1.msra.mxu0 0.0
          %526 = vmatprep.subr.mxu0 0.0
          %527 = vmatpush1.msra.mxu0 0.0
          %528 = vmatprep.subr.mxu0 0.0
          %529 = vmatpush1.msra.mxu0 0.0
          %530 = vmatprep.subr.mxu0 0.0
          %531 = vmatpush1.msra.mxu0 0.0
          %532 = vmatprep.subr.mxu0 0.0
          %533 = vmatpush1.msra.mxu0 0.0
          %534 = vmatprep.subr.mxu0 0.0
          %535 = vmatpush1.msra.mxu0 0.0
          %536 = vmatprep.subr.mxu0 0.0
          %537 = vmatpush1.msra.mxu0 %v421
          %538 = vmatprep.subr.mxu0 0.0
          %539 = vmatpush1.msra.mxu0 %v420
          %540 = vmatprep.subr.mxu0 0.0
          %541 = vmatpush2.msra.mxu0 0.0
          %542 = vmatprep.subr.mxu0 0.0
          %543 = vmatpush2.msra.mxu0 0.0
          %544 = vmatprep.subr.mxu0 0.0
          %545 = vmatpush2.msra.mxu0 0.0
          %546 = vmatprep.subr.mxu0 0.0
          %547 = vmatpush2.msra.mxu0 0.0
          %548 = vmatprep.subr.mxu0 0.0
          %549 = vmatpush2.msra.mxu0 0.0
          %550 = vmatprep.subr.mxu0 0.0
          %551 = vmatpush2.msra.mxu0 0.0
          %552 = vmatprep.subr.mxu0 0.0
          %553 = vmatpush2.msra.mxu0 0.0
          %554 = vmatprep.subr.mxu0 0.0
          %555 = vmatpush2.msra.mxu0 0.0
          %556 = vmatprep.subr.mxu0 0.0
          %557 = vmatpush2.msra.mxu0 0.0
          %558 = vmatprep.subr.mxu0 0.0
          %559 = vmatpush2.msra.mxu0 0.0
          %560 = vmatprep.subr.mxu0 0.0
          %561 = vmatpush2.msra.mxu0 0.0
          %562 = vmatprep.subr.mxu0 0.0
          %563 = vmatpush2.msra.mxu0 0.0
          %564 = vmatprep.subr.mxu0 0.0
          %565 = vmatpush2.msra.mxu0 0.0
          %566 = vmatprep.subr.mxu0 0.0
          %567 = vmatpush2.msra.mxu0 0.0
          %568 = vmatprep.subr.mxu0 0.0
          %569 = vmatpush2.msra.mxu0 0.0
          %570 = vmatprep.subr.mxu0 0.0
          %571 = vmatpush2.msra.mxu0 0.0
          %572 = vmatprep.mubr.f32.mxu0 0.0
          %573 = vmatmul.mubr.f32.gmra.mxu0 %v506
          %v574 = vpop.f32.mrf.mxu0
          %v575 = vadd.f32 %v501, %v574
          %v576 = vpop.f32.mrf.mxu0
          %577 = vdwg.mxu0
          %v578 = vld [vmem:[%s4] sm:$0x1]
          %v580 = vlaneseq
          %v581 = vshrl.u32 %v580, 7
          %v582 = vsub.s32 0, %v581
          %v583 = vrot.slane %v578, %v582
          %v585 = vadd.f32 %v575, %v583
          %586 = vadd.xlane.f32.xlu0 %v585
          %v587 = vpop.xlane.xlu0 %586
          %v588 = vmul.f32 %v587, 0.03125
          %v589 = vsub.f32 %v585, %v588
          %v590 = vmul.f32 %v589, %v418
          %v591 = vmul.f32 %v590, %v590
          %592 = vadd.xlane.f32.xlu0 %v591
          %v593 = vpop.xlane.xlu0 %592
          %v594 = vmul.f32 %v593, 0.03125
          %v595 = vadd.f32 %v594, 1e-05
          %v596 = vrsqrt.pop %v595
          %v597 = vmul.f32 %v589, %v596
          %vm598 = vcmp.gt.f32.partialorder %v597, 0.0
          %v599 = vmul.f32 %v597, 0.01
          %v600 = vsel %vm598, %v597, %v599
          %v601 = vld [vmem:[#allocation3] sm:$0xff]
          %v602 = vld [vmem:[#allocation3 + $0x8] sm:$0xff]
          %v603 = vld [vmem:[#allocation3 + $0x10] sm:$0xff]
          %v604 = vld [vmem:[#allocation3 + $0x18] sm:$0xff]
          %v605 = vld [vmem:[#allocation3 + $0x20] sm:$0xff]
          %v606 = vld [vmem:[#allocation3 + $0x28] sm:$0xff]
          %v607 = vld [vmem:[#allocation3 + $0x30] sm:$0xff]
          %v608 = vld [vmem:[#allocation3 + $0x38] sm:$0xff]
          %v609 = vld [vmem:[#allocation3 + $0x40] sm:$0xff]
          %v610 = vld [vmem:[#allocation3 + $0x48] sm:$0xff]
          %v611 = vld [vmem:[#allocation3 + $0x50] sm:$0xff]
          %v612 = vld [vmem:[#allocation3 + $0x58] sm:$0xff]
          %v613 = vld [vmem:[#allocation3 + $0x60] sm:$0xff]
          %v614 = vld [vmem:[#allocation3 + $0x68] sm:$0xff]
          %v615 = vld [vmem:[#allocation3 + $0x70] sm:$0xff]
          %v616 = vld [vmem:[#allocation3 + $0x78] sm:$0xff]
          %v617 = vld [vmem:[%s6] sm:$0x1]
          %v619 = vlaneseq
          %v620 = vshrl.u32 %v619, 7
          %v621 = vsub.s32 0, %v620
          %v622 = vrot.slane %v617, %v621
          %624 = vmatprep.subr.mxu0 0.0
          %625 = vmatpush1.msra.mxu0 %v616
          %626 = vmatprep.subr.mxu0 0.0
          %627 = vmatpush1.msra.mxu0 %v615
          %628 = vmatprep.subr.mxu0 0.0
          %629 = vmatpush1.msra.mxu0 %v614
          %630 = vmatprep.subr.mxu0 0.0
          %631 = vmatpush1.msra.mxu0 %v613
          %632 = vmatprep.subr.mxu0 0.0
          %633 = vmatpush1.msra.mxu0 %v612
          %634 = vmatprep.subr.mxu0 0.0
          %635 = vmatpush1.msra.mxu0 %v611
          %636 = vmatprep.subr.mxu0 0.0
          %637 = vmatpush1.msra.mxu0 %v610
          %638 = vmatprep.subr.mxu0 0.0
          %639 = vmatpush1.msra.mxu0 %v609
          %640 = vmatprep.subr.mxu0 0.0
          %641 = vmatpush1.msra.mxu0 %v608
          %642 = vmatprep.subr.mxu0 0.0
          %643 = vmatpush1.msra.mxu0 %v607
          %644 = vmatprep.subr.mxu0 0.0
          %645 = vmatpush1.msra.mxu0 %v606
          %646 = vmatprep.subr.mxu0 0.0
          %647 = vmatpush1.msra.mxu0 %v605
          %648 = vmatprep.subr.mxu0 0.0
          %649 = vmatpush1.msra.mxu0 %v604
          %650 = vmatprep.subr.mxu0 0.0
          %651 = vmatpush1.msra.mxu0 %v603
          %652 = vmatprep.subr.mxu0 0.0
          %653 = vmatpush1.msra.mxu0 %v602
          %654 = vmatprep.subr.mxu0 0.0
          %655 = vmatpush1.msra.mxu0 %v601
          %656 = vmatprep.subr.mxu0 0.0
          %657 = vmatpush2.msra.mxu0 0.0
          %658 = vmatprep.subr.mxu0 0.0
          %659 = vmatpush2.msra.mxu0 0.0
          %660 = vmatprep.subr.mxu0 0.0
          %661 = vmatpush2.msra.mxu0 0.0
          %662 = vmatprep.subr.mxu0 0.0
          %663 = vmatpush2.msra.mxu0 0.0
          %664 = vmatprep.subr.mxu0 0.0
          %665 = vmatpush2.msra.mxu0 0.0
          %666 = vmatprep.subr.mxu0 0.0
          %667 = vmatpush2.msra.mxu0 0.0
          %668 = vmatprep.subr.mxu0 0.0
          %669 = vmatpush2.msra.mxu0 0.0
          %670 = vmatprep.subr.mxu0 0.0
          %671 = vmatpush2.msra.mxu0 0.0
          %672 = vmatprep.subr.mxu0 0.0
          %673 = vmatpush2.msra.mxu0 0.0
          %674 = vmatprep.subr.mxu0 0.0
          %675 = vmatpush2.msra.mxu0 0.0
          %676 = vmatprep.subr.mxu0 0.0
          %677 = vmatpush2.msra.mxu0 0.0
          %678 = vmatprep.subr.mxu0 0.0
          %679 = vmatpush2.msra.mxu0 0.0
          %680 = vmatprep.subr.mxu0 0.0
          %681 = vmatpush2.msra.mxu0 0.0
          %682 = vmatprep.subr.mxu0 0.0
          %683 = vmatpush2.msra.mxu0 0.0
          %684 = vmatprep.subr.mxu0 0.0
          %685 = vmatpush2.msra.mxu0 0.0
          %686 = vmatprep.subr.mxu0 0.0
          %687 = vmatpush2.msra.mxu0 0.0
          %688 = vmatprep.mubr.f32.mxu0 0.0
          %689 = vmatmul.mubr.f32.gmra.mxu0 %v600
          %v690 = vpop.f32.mrf.mxu0
          %v691 = vadd.f32 %v622, %v690
          %v692 = vpop.f32.mrf.mxu0
          %693 = vdwg.mxu0
          %694 = vadd.xlane.f32.xlu0 %v691
          %v695 = vpop.xlane.xlu0 %694
          %v696 = vmul.f32 %v695, 0.03125
          %v697 = vsub.f32 %v691, %v696
          %v698 = vmul.f32 %v697, %v418
          %v699 = vmul.f32 %v698, %v698
          %700 = vadd.xlane.f32.xlu0 %v699
          %v701 = vpop.xlane.xlu0 %700
          %v702 = vmul.f32 %v701, 0.03125
          %v703 = vadd.f32 %v702, 1e-05
          %v704 = vrsqrt.pop %v703
          %v705 = vmul.f32 %v697, %v704
          %vm706 = vcmp.gt.f32.partialorder %v705, 0.0
          %v707 = vmul.f32 %v705, 0.01
          %v708 = vsel %vm706, %v705, %v707
          %709 = vst [vmem:[#allocation2] sm:$0xff] %v708
        $region68: #{decoder_forward.1} parent=55 // pred_fallthru
          _
        %v710 = vld [vmem:[#allocation2] sm:$0xff]
        %v711 = vld [vmem:[#allocation6] sm:$0xff]
        %v712 = vld [vmem:[#allocation6 + $0x8] sm:$0xff]
        %v713 = vld [vmem:[#allocation6 + $0x10] sm:$0xff]
        %v714 = vld [vmem:[#allocation6 + $0x18] sm:$0xff]
        %v715 = vld [vmem:[#allocation6 + $0x20] sm:$0xff]
        %v716 = vld [vmem:[#allocation6 + $0x28] sm:$0xff]
        %v717 = vld [vmem:[#allocation6 + $0x30] sm:$0xff]
        %v718 = vld [vmem:[#allocation6 + $0x38] sm:$0xff]
        %v719 = vld [vmem:[#allocation6 + $0x40] sm:$0xff]
        %v720 = vld [vmem:[#allocation6 + $0x48] sm:$0xff]
        %v721 = vld [vmem:[#allocation6 + $0x50] sm:$0xff]
        %v722 = vld [vmem:[#allocation6 + $0x58] sm:$0xff]
        %v723 = vld [vmem:[#allocation6 + $0x60] sm:$0xff]
        %v724 = vld [vmem:[#allocation6 + $0x68] sm:$0xff]
        %v725 = vld [vmem:[#allocation6 + $0x70] sm:$0xff]
        %v726 = vld [vmem:[#allocation6 + $0x78] sm:$0xff]
        %v727 = vld [vmem:[%s409] sm:$0x1]
        %v729 = vlaneseq
        %v730 = vshrl.u32 %v729, 7
        %v731 = vsub.s32 0, %v730
        %v732 = vrot.slane %v727, %v731
        %734 = vmatprep.subr.mxu0 0.0
        %735 = vmatpush1.msra.mxu0 %v726
        %736 = vmatprep.subr.mxu0 0.0
        %737 = vmatpush1.msra.mxu0 %v725
        %738 = vmatprep.subr.mxu0 0.0
        %739 = vmatpush1.msra.mxu0 %v724
        %740 = vmatprep.subr.mxu0 0.0
        %741 = vmatpush1.msra.mxu0 %v723
        %742 = vmatprep.subr.mxu0 0.0
        %743 = vmatpush1.msra.mxu0 %v722
        %744 = vmatprep.subr.mxu0 0.0
        %745 = vmatpush1.msra.mxu0 %v721
        %746 = vmatprep.subr.mxu0 0.0
        %747 = vmatpush1.msra.mxu0 %v720
        %748 = vmatprep.subr.mxu0 0.0
        %749 = vmatpush1.msra.mxu0 %v719
        %750 = vmatprep.subr.mxu0 0.0
        %751 = vmatpush1.msra.mxu0 %v718
        %752 = vmatprep.subr.mxu0 0.0
        %753 = vmatpush1.msra.mxu0 %v717
        %754 = vmatprep.subr.mxu0 0.0
        %755 = vmatpush1.msra.mxu0 %v716
        %756 = vmatprep.subr.mxu0 0.0
        %757 = vmatpush1.msra.mxu0 %v715
        %758 = vmatprep.subr.mxu0 0.0
        %759 = vmatpush1.msra.mxu0 %v714
        %760 = vmatprep.subr.mxu0 0.0
        %761 = vmatpush1.msra.mxu0 %v713
        %762 = vmatprep.subr.mxu0 0.0
        %763 = vmatpush1.msra.mxu0 %v712
        %764 = vmatprep.subr.mxu0 0.0
        %765 = vmatpush1.msra.mxu0 %v711
        %766 = vmatprep.subr.mxu0 0.0
        %767 = vmatpush2.msra.mxu0 0.0
        %768 = vmatprep.subr.mxu0 0.0
        %769 = vmatpush2.msra.mxu0 0.0
        %770 = vmatprep.subr.mxu0 0.0
        %771 = vmatpush2.msra.mxu0 0.0
        %772 = vmatprep.subr.mxu0 0.0
        %773 = vmatpush2.msra.mxu0 0.0
        %774 = vmatprep.subr.mxu0 0.0
        %775 = vmatpush2.msra.mxu0 0.0
        %776 = vmatprep.subr.mxu0 0.0
        %777 = vmatpush2.msra.mxu0 0.0
        %778 = vmatprep.subr.mxu0 0.0
        %779 = vmatpush2.msra.mxu0 0.0
        %780 = vmatprep.subr.mxu0 0.0
        %781 = vmatpush2.msra.mxu0 0.0
        %782 = vmatprep.subr.mxu0 0.0
        %783 = vmatpush2.msra.mxu0 0.0
        %784 = vmatprep.subr.mxu0 0.0
        %785 = vmatpush2.msra.mxu0 0.0
        %786 = vmatprep.subr.mxu0 0.0
        %787 = vmatpush2.msra.mxu0 0.0
        %788 = vmatprep.subr.mxu0 0.0
        %789 = vmatpush2.msra.mxu0 0.0
        %790 = vmatprep.subr.mxu0 0.0
        %791 = vmatpush2.msra.mxu0 0.0
        %792 = vmatprep.subr.mxu0 0.0
        %793 = vmatpush2.msra.mxu0 0.0
        %794 = vmatprep.subr.mxu0 0.0
        %795 = vmatpush2.msra.mxu0 0.0
        %796 = vmatprep.subr.mxu0 0.0
        %797 = vmatpush2.msra.mxu0 0.0
        %798 = vmatprep.mubr.f32.mxu0 0.0
        %799 = vmatmul.mubr.f32.gmra.mxu0 %v710
        %v800 = vpop.f32.mrf.mxu0
        %v801 = vadd.f32 %v732, %v800
        %v802 = vpop.f32.mrf.mxu0
        %803 = vdwg.mxu0
        %v804 = vxor.u32 %v801, 2147483648
        %v805 = vmul.f32 %v804, 1.442695
        %v806 = vpow.pop %v805
        %v807 = vadd.f32 %v806, 1.0
        %v808 = vrcp.pop %v807
        %v809 = vmul.f32 1.0, %v808
        %810 = vst [vmem:[%s398] sm:$0xff] %v809
        %s811 = sand.u32 %s256, 1
        %s812 = scalar_lea.sflag [#allocation5], %s811
        %s813 = sand.u32 %s256, 1
        %s814 = smul.addr %s813, 8
        %s815 = scalar_lea.vmem [#allocation8], %s814
        // Predicated region
        $region69: #{decoder_forward.1} parent=55 // pred_check
          %p816 = pneg %p266
        $region70: #{decoder_forward.1} parent=55 // pred_check_branch
          %818 = sbr.rel (%p816) target = $region72
        $region71: #{decoder_forward.1} parent=55 // pred_region
          %s820 = ssub.s32 128, 128
          %821 = vsyncadd %s812, %s820
          %s822 = sadd.s32 %s30, %s29
          %s823 = smul.addr %s822, 128
          %s824 = scalar_lea.hbm %s9, %s823
          %s826 = sshll.u32 %s815, 4
          %s827 = int_to_ptr.vmem [resolvable:$true] %s826
          %829 = dma.vmem_to_hbm [thread:$0]  %s827, 128, %s824, %s812
        $region72: #{decoder_forward.1} parent=55 // pred_fallthru
          _
      $region56: #{decoder_forward.1} parent=5 // pred_fallthru
        _
      %p830 = scmp.le.s32.totalorder 2, %s20
      // Predicated region
      $region73: #{decoder_forward.1} parent=5 // pred_check
        %p831 = pneg %p830
      $region74: #{decoder_forward.1} parent=5 // pred_check_branch
        %833 = sbr.rel (%p831) target = $region76
      $region75: #{decoder_forward.1} parent=5 // pred_region
        %s834 = ssub.s32 %s20, 2
        // Predicated region
        $region77: #{decoder_forward.1} parent=75 // pred_check
          %p835 = pneg %p272
        $region78: #{decoder_forward.1} parent=75 // pred_check_branch
          %837 = sbr.rel (%p835) target = $region80
        $region79: #{decoder_forward.1} parent=75 // pred_region
          %s838 = sand.u32 %s257, 1
          %s839 = scalar_lea.sflag [#allocation5], %s838
          %s840 = sand.u32 %s257, 1
          %s841 = smul.addr %s840, 8
          %s842 = scalar_lea.vmem [#allocation8], %s841
          %843 = dma.done %s839, 128
        $region80: #{decoder_forward.1} parent=75 // pred_fallthru
          _
      $region76: #{decoder_forward.1} parent=5 // pred_fallthru
        _
    $region6: #{decoder_forward.1} parent=1 // loop_footer
      %s24 = sadd.s32 1, %s20
    $region7: #{decoder_forward.1} parent=1 // loop_footer_branch
      %19 = sbr.rel target = $region3
    $region8: #{decoder_forward.1} parent=1 // loop_exit
      _
    %844 = vsyncpa [#allocation4], 1
    %s845 = scalar_lea.sflag [#allocation4], 1
    %846 = vsyncpa %s845, 1
    %847 = vsyncpa [#allocation7], 1
    %848 = vsyncpa [#allocation5], 1
    %s849 = scalar_lea.sflag [#allocation5], 1
    %850 = vsyncpa %s849, 1

</llo_original>
